<compile_context>
chip_gen: v7x
topology: tpu7x:2x2x1
jax: 0.10.0
libtpu: 0.0.40
codegen_flags: <defaults>
</compile_context>

<pallas_src>
import jax
import jax.numpy as jnp
from jax.experimental import pallas as pl
from jax.experimental.pallas import tpu as pltpu

NUM_IN = 784
NUM_OUT = 10
OUT_PAD = 128      # pad logits to one full lane group so the store is unmasked
TB_MAX = 1024      # batch tile (rows); big tiles amortize ~0.35us per-step cost


def _round_up(x, m):
    return (x + m - 1) // m * m


def mlp_kernel(x_ref, w1_ref, b1_ref, w2_ref, b2_ref, o_ref):
    # x_ref:  (TB, 784)  f32       w1_ref: (784, H)  bf16    b1_ref: (1, H)    f32
    # w2_ref: (H, 128)   bf16      b2_ref: (1, 128)  f32     o_ref:  (TB, 128) f32
    # Fused input cast: x arrives as f32 straight from HBM, cast on the VPU.
    x = x_ref[...].astype(jnp.bfloat16)
    # linear1: bf16 MXU matmul, f32 accumulation; bias + ReLU in f32 (VPU).
    h = jnp.dot(x, w1_ref[...], preferred_element_type=jnp.float32)
    h = jnp.maximum(h + b1_ref[...], 0.0)
    # linear2: cast the hidden activation to bf16 right before the dot.
    y = jnp.dot(h.astype(jnp.bfloat16), w2_ref[...],
                preferred_element_type=jnp.float32)
    o_ref[...] = (y + b2_ref[...]).astype(o_ref.dtype)


def mnist_mlp_forward(x_nchw, w1, b1, w2, b2):
    """x_nchw: (B, 1, 28, 28) f32; w1: (784, H); b1: (H,); w2: (H, 10); b2: (10,).

    Returns logits (B, 10) float32.
    """
    B = x_nchw.shape[0]
    x_flat = x_nchw.reshape(B, -1)                 # (B, 784) f32, same as torch flatten
    num_in = x_flat.shape[1]
    num_hid = w1.shape[1]
    num_out = w2.shape[1]

    # Weights as bf16 matmul operands (MXU-native, halves weight bytes); these
    # are tiny (<1 MB) one-shot casts. Biases stay f32.
    w1_bf = w1.astype(jnp.bfloat16)
    w2_p = jnp.pad(w2.astype(jnp.bfloat16), ((0, 0), (0, OUT_PAD - num_out)))
    b1_p = b1.reshape(1, -1).astype(jnp.float32)
    b2_p = jnp.pad(b2.reshape(1, -1).astype(jnp.float32),
                   ((0, 0), (0, OUT_PAD - num_out)))

    # Batch tile: multiple of 8 (f32 sublane tiling; 16 keeps bf16-friendly too),
    # capped at TB_MAX, and sized so the grid has >= 2 steps when B >= 32 so
    # both v7x TensorCores get work. No input padding: Pallas masks the
    # partial last block.
    tb = min(TB_MAX, _round_up(pl.cdiv(B, 2), 16))
    grid = (pl.cdiv(B, tb),)

    flops = 2 * B * num_in * num_hid + 2 * B * num_hid * OUT_PAD
    bytes_accessed = (x_flat.size * 4 + w1_bf.size * 2 + w2_p.size * 2
                      + b1_p.size * 4 + b2_p.size * 4 + B * OUT_PAD * 4)

    out = pl.pallas_call(
        mlp_kernel,
        out_shape=jax.ShapeDtypeStruct((B, OUT_PAD), jnp.float32),
        grid=grid,
        in_specs=[
            pl.BlockSpec((tb, num_in), lambda i: (i, 0)),         # x: tiled over batch
            pl.BlockSpec((num_in, num_hid), lambda i: (0, 0)),    # w1: VMEM-resident
            pl.BlockSpec((1, num_hid), lambda i: (0, 0)),         # b1: VMEM-resident
            pl.BlockSpec((num_hid, OUT_PAD), lambda i: (0, 0)),   # w2: VMEM-resident
            pl.BlockSpec((1, OUT_PAD), lambda i: (0, 0)),         # b2: VMEM-resident
        ],
        out_specs=pl.BlockSpec((tb, OUT_PAD), lambda i: (i, 0)),
        compiler_params=pltpu.CompilerParams(
            # Independent batch tiles: shards across both TCs on v7x, harmless elsewhere.
            dimension_semantics=("parallel",),
        ),
        cost_estimate=pl.CostEstimate(
            flops=flops, transcendentals=0, bytes_accessed=bytes_accessed),
    )(x_flat, w1_bf, b1_p, w2_p, b2_p)

    # Drop the lane padding (columns >= 10 are zeros from the padded W2/b2).
    return out[:, :num_out]


def init_params(key, num_inputs=NUM_IN, num_outputs=NUM_OUT, num_features=256):
    """Deterministic synthetic init matching nn.Linear parameter shapes.

    Weights are stored transposed relative to PyTorch ((in, out) instead of
    (out, in)) so the kernel does x @ W directly; semantics are identical.
    """
    k1, k2, k3, k4 = jax.random.split(key, 4)
    bound1 = 1.0 / jnp.sqrt(num_inputs)
    bound2 = 1.0 / jnp.sqrt(num_features)
    w1 = jax.random.uniform(k1, (num_inputs, num_features), jnp.float32, -bound1, bound1)
    b1 = jax.random.uniform(k2, (num_features,), jnp.float32, -bound1, bound1)
    w2 = jax.random.uniform(k3, (num_features, num_outputs), jnp.float32, -bound2, bound2)
    b2 = jax.random.uniform(k4, (num_outputs,), jnp.float32, -bound2, bound2)
    return w1, b1, w2, b2


if __name__ == "__main__":
    key = jax.random.PRNGKey(0)
    k_x, k_p = jax.random.split(key)

    # Small MNIST-shaped batch: (B, C, H, W) = (2, 1, 28, 28)
    B = 2
    x = jax.random.normal(k_x, (B, 1, 28, 28), dtype=jnp.float32)
    w1, b1, w2, b2 = init_params(k_p)

    out = mnist_mlp_forward(x, w1, b1, w2, b2)
    out = jax.block_until_ready(out)
    assert out.shape == (B, NUM_OUT)

    # bf16-consistent reference (same cast points as the kernel, f32 accumulation).
    x_bf = x.reshape(B, -1).astype(jnp.bfloat16).astype(jnp.float32)
    w1_r = w1.astype(jnp.bfloat16).astype(jnp.float32)
    w2_r = w2.astype(jnp.bfloat16).astype(jnp.float32)
    h_ref = jnp.maximum(x_bf @ w1_r + b1, 0.0)
    ref = h_ref.astype(jnp.bfloat16).astype(jnp.float32) @ w2_r + b2
    assert jnp.allclose(out, ref, atol=2e-2, rtol=2e-2), \
        float(jnp.max(jnp.abs(out - ref)))

    # Sanity vs. the pure-f32 module forward (looser tol: bf16 matmul operands).
    ref_f32 = jnp.maximum(x.reshape(B, -1) @ w1 + b1, 0.0) @ w2 + b2
    assert jnp.allclose(out, ref_f32, atol=1e-1, rtol=1e-1)

    print("KERNEL_OK")
</pallas_src>

<mosaic_0001>
module attributes {stable_mosaic.version = 11 : i64} {
  func.func @mlp_kernel(%arg0: i32, %arg1: memref<16x784xf32, #tpu.memory_space<vmem>>, %arg2: memref<784x256xbf16, #tpu.memory_space<vmem>>, %arg3: memref<1x256xf32, #tpu.memory_space<vmem>>, %arg4: memref<256x128xbf16, #tpu.memory_space<vmem>>, %arg5: memref<1x128xf32, #tpu.memory_space<vmem>>, %arg6: memref<16x128xf32, #tpu.memory_space<vmem>>) attributes {dimension_semantics = [#tpu.dimension_semantics<parallel>], iteration_bounds = array<i64: 1>, scalar_prefetch = 0 : i64, scratch_operands = 0 : i64, tpu.core_type = #tpu.core_type<tc>, window_params = [{transform_indices = @transform_0, window_bounds = array<i64: 16, 784>}, {pipeline_mode = #tpu.pipeline_mode<synchronous>, transform_indices = @transform_1, window_bounds = array<i64: 784, 256>}, {pipeline_mode = #tpu.pipeline_mode<synchronous>, transform_indices = @transform_2, window_bounds = array<i64: 1, 256>}, {pipeline_mode = #tpu.pipeline_mode<synchronous>, transform_indices = @transform_3, window_bounds = array<i64: 256, 128>}, {pipeline_mode = #tpu.pipeline_mode<synchronous>, transform_indices = @transform_4, window_bounds = array<i64: 1, 128>}, {transform_indices = @transform_5, window_bounds = array<i64: 16, 128>}]} {
    %c0 = arith.constant 0 : index
    %c0_0 = arith.constant 0 : index
    %0 = vector.load %arg1[%c0, %c0_0] : memref<16x784xf32, #tpu.memory_space<vmem>>, vector<16x784xf32>
    %1 = arith.truncf %0 : vector<16x784xf32> to vector<16x784xbf16>
    %c0_1 = arith.constant 0 : index
    %c0_2 = arith.constant 0 : index
    %2 = vector.load %arg2[%c0_1, %c0_2] : memref<784x256xbf16, #tpu.memory_space<vmem>>, vector<784x256xbf16>
    %cst = arith.constant dense<0.000000e+00> : vector<16x256xf32>
    %3 = tpu.matmul %1, %2, %cst {dimension_numbers = #tpu.dot_dimension_numbers<[1], [0], [0], [1], [0, 0, 1, 1], [], []>} : vector<16x784xbf16>, vector<784x256xbf16>, vector<16x256xf32> -> vector<16x256xf32>
    %c0_3 = arith.constant 0 : index
    %c0_4 = arith.constant 0 : index
    %4 = vector.load %arg3[%c0_3, %c0_4] : memref<1x256xf32, #tpu.memory_space<vmem>>, vector<1x256xf32>
    %5 = vector.broadcast %4 : vector<1x256xf32> to vector<16x256xf32>
    %6 = arith.addf %3, %5 : vector<16x256xf32>
    %cst_5 = arith.constant 0.000000e+00 : f32
    %7 = vector.broadcast %cst_5 : f32 to vector<16x256xf32>
    %8 = arith.maximumf %6, %7 : vector<16x256xf32>
    %9 = arith.truncf %8 : vector<16x256xf32> to vector<16x256xbf16>
    %c0_6 = arith.constant 0 : index
    %c0_7 = arith.constant 0 : index
    %10 = vector.load %arg4[%c0_6, %c0_7] : memref<256x128xbf16, #tpu.memory_space<vmem>>, vector<256x128xbf16>
    %cst_8 = arith.constant dense<0.000000e+00> : vector<16x128xf32>
    %11 = tpu.matmul %9, %10, %cst_8 {dimension_numbers = #tpu.dot_dimension_numbers<[1], [0], [0], [1], [0, 0, 1, 1], [], []>} : vector<16x256xbf16>, vector<256x128xbf16>, vector<16x128xf32> -> vector<16x128xf32>
    %c0_9 = arith.constant 0 : index
    %c0_10 = arith.constant 0 : index
    %12 = vector.load %arg5[%c0_9, %c0_10] : memref<1x128xf32, #tpu.memory_space<vmem>>, vector<1x128xf32>
    %13 = vector.broadcast %12 : vector<1x128xf32> to vector<16x128xf32>
    %14 = arith.addf %11, %13 : vector<16x128xf32>
    %c0_11 = arith.constant 0 : index
    %c0_12 = arith.constant 0 : index
    %15 = vector.load %arg6[%c0_11, %c0_12] : memref<16x128xf32, #tpu.memory_space<vmem>>, vector<16x128xf32>
    tpu.vector_store %arg6[%c0_11, %c0_12], %14 {strides = array<i32>} : memref<16x128xf32, #tpu.memory_space<vmem>>, vector<16x128xf32>,
    return
  }
  func.func @transform_0(%arg0: i32) -> (i32, i32) {
    %c0_i32 = arith.constant 0 : i32
    %c0_i32_0 = arith.constant 0 : i32
    return %arg0, %c0_i32 : i32, i32
  }
  func.func @transform_1(%arg0: i32) -> (i32, i32) {
    %c0_i32 = arith.constant 0 : i32
    %c0_i32_0 = arith.constant 0 : i32
    %c0_i32_1 = arith.constant 0 : i32
    return %c0_i32, %c0_i32_0 : i32, i32
  }
  func.func @transform_2(%arg0: i32) -> (i32, i32) {
    %c0_i32 = arith.constant 0 : i32
    %c0_i32_0 = arith.constant 0 : i32
    %c0_i32_1 = arith.constant 0 : i32
    return %c0_i32, %c0_i32_0 : i32, i32
  }
  func.func @transform_3(%arg0: i32) -> (i32, i32) {
    %c0_i32 = arith.constant 0 : i32
    %c0_i32_0 = arith.constant 0 : i32
    %c0_i32_1 = arith.constant 0 : i32
    return %c0_i32, %c0_i32_0 : i32, i32
  }
  func.func @transform_4(%arg0: i32) -> (i32, i32) {
    %c0_i32 = arith.constant 0 : i32
    %c0_i32_0 = arith.constant 0 : i32
    %c0_i32_1 = arith.constant 0 : i32
    return %c0_i32, %c0_i32_0 : i32, i32
  }
  func.func @transform_5(%arg0: i32) -> (i32, i32) {
    %c0_i32 = arith.constant 0 : i32
    %c0_i32_0 = arith.constant 0 : i32
    return %arg0, %c0_i32 : i32, i32
  }
}

</mosaic_0001>

<llo_original>
// kernel: tpu_custom_call.1
$region0: #{tpu_custom_call.1}
  #allocation0 [shape = 'u32[]', space=smem, size = 0x4, offset = 0x4, fixed_abs, tag = 'smem constant byte address 0x4 - core index']
  #allocation1 [shape = 'u32[144,128]{1,0:T(1,128)}', space=vmem, size = 0x12000, scoped, tag = 'internal scratch']
  %s0 = inlined_call_operand.hbm [shape: f32[2,784], index: 0, kind: input, shape index: {}]
  %s1 = inlined_call_operand.hbm [shape: bf16[784,256], index: 1, kind: input, shape index: {}]
  %s2 = inlined_call_operand.vmem [shape: f32[1,256], index: 2, kind: input, shape index: {}]
  %s3 = inlined_call_operand.hbm [shape: bf16[256,128], index: 3, kind: input, shape index: {}]
  %s4 = inlined_call_operand.vmem [shape: f32[1,128], index: 4, kind: input, shape index: {}]
  %s5 = inlined_call_operand.hbm [shape: f32[2,128], index: 5, kind: output, shape index: {}]
  %s6 = sld [smem:[#allocation0]]
  $region42: #{tpu_custom_call.1} parent=0
    _
  %s8 = ssub.s32 1, %s6
  %s9 = scalar_select 0, %s8, %s6
  $region1: #{tpu_custom_call.1} parent=0
    #allocation2 [shape = 'u8[57344]{0}', space=vmem, size = 0xe000, scoped, tag = 'input window, operand 0, single buffered']
    #allocation3 [shape = 's32[1]{0}', space=sflag, size = 0x4, scoped, tag = 'scoped memory for tpu_custom_call.1']
    #allocation4 [shape = 's32[1]{0}', space=sflag, size = 0x4, scoped, tag = 'scoped memory for tpu_custom_call.1']
    #allocation5 [shape = 'u8[401408]{0}', space=vmem, size = 0x62000, scoped, tag = 'input window, operand 1, single buffered']
    #allocation6 [shape = 's32[1]{0}', space=sflag, size = 0x4, scoped, tag = 'scoped memory for tpu_custom_call.1']
    #allocation7 [shape = 'u8[65536]{0}', space=vmem, size = 0x10000, scoped, tag = 'input window, operand 3, single buffered']
    #allocation8 [shape = 'u8[8192]{0}', space=vmem, size = 0x2000, scoped, tag = 'output window, operand 0, single buffered']
    %10 = vsyncpa [#allocation3], 0
    %11 = vsyncpa [#allocation6], 0
    %12 = vsyncpa [#allocation4], 0
    // Predicated region
    $region2: #{tpu_custom_call.1} parent=1 // pred_check
      _
    $region3: #{tpu_custom_call.1} parent=1 // pred_check_branch
      %14 = sbr.rel (0) target = $region5
    $region4: #{tpu_custom_call.1} parent=1 // pred_region
      %s16 = ssub.s32 1792, 224
      %17 = vsyncadd [#allocation3], %s16
      %s18 = sshll.u32 [#allocation2], 4
      %s19 = int_to_ptr.vmem [resolvable:$true] %s18
      %24 = dma.hbm_to_vmem [thread:$0]  %s0, 224, %s19, [#allocation3], 224, 224, 14
    $region5: #{tpu_custom_call.1} parent=1 // pred_fallthru
      _
    // Predicated region
    $region6: #{tpu_custom_call.1} parent=1 // pred_check
      _
    $region7: #{tpu_custom_call.1} parent=1 // pred_check_branch
      %26 = sbr.rel (0) target = $region9
    $region8: #{tpu_custom_call.1} parent=1 // pred_region
      %s28 = ssub.s32 12544, 12544
      %29 = vsyncadd [#allocation6], %s28
      %s30 = sshll.u32 [#allocation5], 4
      %s31 = int_to_ptr.vmem [resolvable:$true] %s30
      %36 = dma.hbm_to_vmem [thread:$0]  %s1, 12544, %s31, [#allocation6], 128, 128, 8
    $region9: #{tpu_custom_call.1} parent=1 // pred_fallthru
      _
    // Predicated region
    $region10: #{tpu_custom_call.1} parent=1 // pred_check
      _
    $region11: #{tpu_custom_call.1} parent=1 // pred_check_branch
      %38 = sbr.rel (0) target = $region13
    $region12: #{tpu_custom_call.1} parent=1 // pred_region
      _
    $region13: #{tpu_custom_call.1} parent=1 // pred_fallthru
      _
    // Predicated region
    $region14: #{tpu_custom_call.1} parent=1 // pred_check
      _
    $region15: #{tpu_custom_call.1} parent=1 // pred_check_branch
      %40 = sbr.rel (0) target = $region17
    $region16: #{tpu_custom_call.1} parent=1 // pred_region
      %s42 = ssub.s32 2048, 2048
      %43 = vsyncadd [#allocation6], %s42
      %s44 = sshll.u32 [#allocation7], 4
      %s45 = int_to_ptr.vmem [resolvable:$true] %s44
      %50 = dma.hbm_to_vmem [thread:$0]  %s3, 2048, %s45, [#allocation6], 64, 64, 4
    $region17: #{tpu_custom_call.1} parent=1 // pred_fallthru
      _
    // Predicated region
    $region18: #{tpu_custom_call.1} parent=1 // pred_check
      _
    $region19: #{tpu_custom_call.1} parent=1 // pred_check_branch
      %52 = sbr.rel (0) target = $region21
    $region20: #{tpu_custom_call.1} parent=1 // pred_region
      _
    $region21: #{tpu_custom_call.1} parent=1 // pred_fallthru
      _
    // Predicated region
    $region22: #{tpu_custom_call.1} parent=1 // pred_check
      _
    $region23: #{tpu_custom_call.1} parent=1 // pred_check_branch
      %54 = sbr.rel (0) target = $region25
    $region24: #{tpu_custom_call.1} parent=1 // pred_region
      %55 = dma.done [#allocation3], 1792
    $region25: #{tpu_custom_call.1} parent=1 // pred_fallthru
      _
    // Predicated region
    $region26: #{tpu_custom_call.1} parent=1 // pred_check
      _
    $region27: #{tpu_custom_call.1} parent=1 // pred_check_branch
      %57 = sbr.rel (0) target = $region29
    $region28: #{tpu_custom_call.1} parent=1 // pred_region
      %58 = dma.done [#allocation6], 12544
    $region29: #{tpu_custom_call.1} parent=1 // pred_fallthru
      _
    // Predicated region
    $region30: #{tpu_custom_call.1} parent=1 // pred_check
      _
    $region31: #{tpu_custom_call.1} parent=1 // pred_check_branch
      %60 = sbr.rel (0) target = $region33
    $region32: #{tpu_custom_call.1} parent=1 // pred_region
      %61 = dma.done [#allocation6], 2048
    $region33: #{tpu_custom_call.1} parent=1 // pred_fallthru
      _
    %v63 = vld [vmem:[#allocation2] sm:$0xff]
    %v64 = vld [vmem:[#allocation2 + $0x8] sm:$0x3f]
    %v65 = vld [vmem:[#allocation2 + $0xe] sm:$0xff]
    %v66 = vld [vmem:[#allocation2 + $0x16] sm:$0x3f]
    %v67 = vld [vmem:[#allocation2 + $0x1c] sm:$0xff]
    %v68 = vld [vmem:[#allocation2 + $0x24] sm:$0x3f]
    %v69 = vld [vmem:[#allocation2 + $0x2a] sm:$0xff]
    %v70 = vld [vmem:[#allocation2 + $0x32] sm:$0x3f]
    %v71 = vld [vmem:[#allocation2 + $0x38] sm:$0xff]
    %v72 = vld [vmem:[#allocation2 + $0x40] sm:$0x3f]
    %v73 = vld [vmem:[#allocation2 + $0x46] sm:$0xff]
    %v74 = vld [vmem:[#allocation2 + $0x4e] sm:$0x3f]
    %v75 = vld [vmem:[#allocation2 + $0x54] sm:$0xff]
    %v76 = vld [vmem:[#allocation2 + $0x5c] sm:$0x3f]
    %v77 = vld [vmem:[#allocation2 + $0x62] sm:$0xff]
    %v78 = vld [vmem:[#allocation2 + $0x6a] sm:$0x3f]
    %v95 = vcombine.low %v63, %v65
    %v96 = vcombine.high %v63, %v65
    %v97 = vcombine.low %v67, %v69
    %v98 = vcombine.high %v67, %v69
    %v100 = vunpack.c.l.s4 1983009808
    %v101 = vunpack.c.0.s8 %v100
    %v102 = vlaneseq
    %v103 = vshrl.u32 %v102, 7
    %v104 = vsub.s32 %v101, %v103
    %v105 = vrot.slane %v95, %v104
    %v107 = vunpack.c.l.s4 1983009808
    %v108 = vunpack.c.0.s8 %v107
    %v109 = vlaneseq
    %v110 = vshrl.u32 %v109, 7
    %v111 = vsub.s32 %v108, %v110
    %v112 = vrot.slane %v96, %v111
    %v114 = vunpack.c.l.s4 1983009808
    %v115 = vunpack.c.0.s8 %v114
    %v116 = vlaneseq
    %v117 = vshrl.u32 %v116, 7
    %v118 = vsub.s32 %v115, %v117
    %v119 = vrot.slane %v97, %v118
    %v121 = vunpack.c.l.s4 1983009808
    %v122 = vunpack.c.0.s8 %v121
    %v123 = vlaneseq
    %v124 = vshrl.u32 %v123, 7
    %v125 = vsub.s32 %v122, %v124
    %v126 = vrot.slane %v98, %v125
    %v127 = vcombine.low %v105, %v119
    %v128 = vcombine.high %v105, %v119
    %v129 = vcombine.low %v112, %v126
    %v130 = vcombine.high %v112, %v126
    %v131 = vcombine.low %v64, %v66
    %v132 = vcombine.high %v64, %v66
    %v133 = vcombine.low %v68, %v70
    %v134 = vcombine.high %v68, %v70
    %v136 = vunpack.c.l.s4 1983009808
    %v137 = vunpack.c.0.s8 %v136
    %v138 = vlaneseq
    %v139 = vshrl.u32 %v138, 7
    %v140 = vsub.s32 %v137, %v139
    %v141 = vrot.slane %v131, %v140
    %v143 = vunpack.c.l.s4 1983009808
    %v144 = vunpack.c.0.s8 %v143
    %v145 = vlaneseq
    %v146 = vshrl.u32 %v145, 7
    %v147 = vsub.s32 %v144, %v146
    %v148 = vrot.slane %v132, %v147
    %v150 = vunpack.c.l.s4 1983009808
    %v151 = vunpack.c.0.s8 %v150
    %v152 = vlaneseq
    %v153 = vshrl.u32 %v152, 7
    %v154 = vsub.s32 %v151, %v153
    %v155 = vrot.slane %v133, %v154
    %v157 = vunpack.c.l.s4 1983009808
    %v158 = vunpack.c.0.s8 %v157
    %v159 = vlaneseq
    %v160 = vshrl.u32 %v159, 7
    %v161 = vsub.s32 %v158, %v160
    %v162 = vrot.slane %v134, %v161
    %v163 = vcombine.low %v141, %v155
    %v164 = vcombine.high %v141, %v155
    %v165 = vcombine.low %v148, %v162
    %v166 = vcombine.low %v71, %v73
    %v167 = vcombine.high %v71, %v73
    %v168 = vcombine.low %v75, %v77
    %v169 = vcombine.high %v75, %v77
    %v171 = vunpack.c.l.s4 1983009808
    %v172 = vunpack.c.0.s8 %v171
    %v173 = vlaneseq
    %v174 = vshrl.u32 %v173, 7
    %v175 = vsub.s32 %v172, %v174
    %v176 = vrot.slane %v166, %v175
    %v178 = vunpack.c.l.s4 1983009808
    %v179 = vunpack.c.0.s8 %v178
    %v180 = vlaneseq
    %v181 = vshrl.u32 %v180, 7
    %v182 = vsub.s32 %v179, %v181
    %v183 = vrot.slane %v167, %v182
    %v185 = vunpack.c.l.s4 1983009808
    %v186 = vunpack.c.0.s8 %v185
    %v187 = vlaneseq
    %v188 = vshrl.u32 %v187, 7
    %v189 = vsub.s32 %v186, %v188
    %v190 = vrot.slane %v168, %v189
    %v192 = vunpack.c.l.s4 1983009808
    %v193 = vunpack.c.0.s8 %v192
    %v194 = vlaneseq
    %v195 = vshrl.u32 %v194, 7
    %v196 = vsub.s32 %v193, %v195
    %v197 = vrot.slane %v169, %v196
    %v198 = vcombine.low %v176, %v190
    %v199 = vcombine.high %v176, %v190
    %v200 = vcombine.low %v183, %v197
    %v201 = vcombine.high %v183, %v197
    %v202 = vcombine.low %v72, %v74
    %v203 = vcombine.high %v72, %v74
    %v204 = vcombine.low %v76, %v78
    %v205 = vcombine.high %v76, %v78
    %v207 = vunpack.c.l.s4 1983009808
    %v208 = vunpack.c.0.s8 %v207
    %v209 = vlaneseq
    %v210 = vshrl.u32 %v209, 7
    %v211 = vsub.s32 %v208, %v210
    %v212 = vrot.slane %v202, %v211
    %v214 = vunpack.c.l.s4 1983009808
    %v215 = vunpack.c.0.s8 %v214
    %v216 = vlaneseq
    %v217 = vshrl.u32 %v216, 7
    %v218 = vsub.s32 %v215, %v217
    %v219 = vrot.slane %v203, %v218
    %v221 = vunpack.c.l.s4 1983009808
    %v222 = vunpack.c.0.s8 %v221
    %v223 = vlaneseq
    %v224 = vshrl.u32 %v223, 7
    %v225 = vsub.s32 %v222, %v224
    %v226 = vrot.slane %v204, %v225
    %v228 = vunpack.c.l.s4 1983009808
    %v229 = vunpack.c.0.s8 %v228
    %v230 = vlaneseq
    %v231 = vshrl.u32 %v230, 7
    %v232 = vsub.s32 %v229, %v231
    %v233 = vrot.slane %v205, %v232
    %v234 = vcombine.low %v212, %v226
    %v235 = vcombine.high %v212, %v226
    %v236 = vcombine.low %v219, %v233
    %v251 = vpack.c.bf16 %v198, %v127
    %v252 = vpack.c.bf16 %v199, %v128
    %v253 = vpack.c.bf16 %v200, %v129
    %v254 = vpack.c.bf16 %v201, %v130
    %v255 = vpack.c.bf16 %v234, %v163
    %v256 = vpack.c.bf16 %v235, %v164
    %v257 = vpack.c.bf16 %v236, %v165
    %v258 = vld [vmem:[#allocation5] sm:$0xff]
    %v259 = vld [vmem:[#allocation5 + $0x8] sm:$0xff]
    %v260 = vld [vmem:[#allocation5 + $0x10] sm:$0xff]
    %v261 = vld [vmem:[#allocation5 + $0x18] sm:$0xff]
    %v262 = vld [vmem:[#allocation5 + $0x20] sm:$0xff]
    %v263 = vld [vmem:[#allocation5 + $0x28] sm:$0xff]
    %v264 = vld [vmem:[#allocation5 + $0x30] sm:$0xff]
    %v265 = vld [vmem:[#allocation5 + $0x38] sm:$0xff]
    %v266 = vld [vmem:[#allocation5 + $0x40] sm:$0xff]
    %v267 = vld [vmem:[#allocation5 + $0x48] sm:$0xff]
    %v268 = vld [vmem:[#allocation5 + $0x50] sm:$0xff]
    %v269 = vld [vmem:[#allocation5 + $0x58] sm:$0xff]
    %v270 = vld [vmem:[#allocation5 + $0x60] sm:$0xff]
    %v271 = vld [vmem:[#allocation5 + $0x68] sm:$0xff]
    %v272 = vld [vmem:[#allocation5 + $0x70] sm:$0xff]
    %v273 = vld [vmem:[#allocation5 + $0x78] sm:$0xff]
    %v274 = vld [vmem:[#allocation5 + $0x80] sm:$0xff]
    %v275 = vld [vmem:[#allocation5 + $0x88] sm:$0xff]
    %v276 = vld [vmem:[#allocation5 + $0x90] sm:$0xff]
    %v277 = vld [vmem:[#allocation5 + $0x98] sm:$0xff]
    %v278 = vld [vmem:[#allocation5 + $0xa0] sm:$0xff]
    %v279 = vld [vmem:[#allocation5 + $0xa8] sm:$0xff]
    %v280 = vld [vmem:[#allocation5 + $0xb0] sm:$0xff]
    %v281 = vld [vmem:[#allocation5 + $0xb8] sm:$0xff]
    %v282 = vld [vmem:[#allocation5 + $0xc0] sm:$0xff]
    %v283 = vld [vmem:[#allocation5 + $0xc8] sm:$0xff]
    %v284 = vld [vmem:[#allocation5 + $0xd0] sm:$0xff]
    %v285 = vld [vmem:[#allocation5 + $0xd8] sm:$0xff]
    %v286 = vld [vmem:[#allocation5 + $0xe0] sm:$0xff]
    %v287 = vld [vmem:[#allocation5 + $0xe8] sm:$0xff]
    %v288 = vld [vmem:[#allocation5 + $0xf0] sm:$0xff]
    %v289 = vld [vmem:[#allocation5 + $0xf8] sm:$0xff]
    %v290 = vld [vmem:[#allocation5 + $0x100] sm:$0xff]
    %v291 = vld [vmem:[#allocation5 + $0x108] sm:$0xff]
    %v292 = vld [vmem:[#allocation5 + $0x110] sm:$0xff]
    %v293 = vld [vmem:[#allocation5 + $0x118] sm:$0xff]
    %v294 = vld [vmem:[#allocation5 + $0x120] sm:$0xff]
    %v295 = vld [vmem:[#allocation5 + $0x128] sm:$0xff]
    %v296 = vld [vmem:[#allocation5 + $0x130] sm:$0xff]
    %v297 = vld [vmem:[#allocation5 + $0x138] sm:$0xff]
    %v298 = vld [vmem:[#allocation5 + $0x140] sm:$0xff]
    %v299 = vld [vmem:[#allocation5 + $0x148] sm:$0xff]
    %v300 = vld [vmem:[#allocation5 + $0x150] sm:$0xff]
    %v301 = vld [vmem:[#allocation5 + $0x158] sm:$0xff]
    %v302 = vld [vmem:[#allocation5 + $0x160] sm:$0xff]
    %v303 = vld [vmem:[#allocation5 + $0x168] sm:$0xff]
    %v304 = vld [vmem:[#allocation5 + $0x170] sm:$0xff]
    %v305 = vld [vmem:[#allocation5 + $0x178] sm:$0xff]
    %v306 = vld [vmem:[#allocation5 + $0x180] sm:$0xff]
    %v307 = vld [vmem:[#allocation5 + $0x188] sm:$0xff]
    %v308 = vld [vmem:[#allocation5 + $0x190] sm:$0xff]
    %v309 = vld [vmem:[#allocation5 + $0x198] sm:$0xff]
    %v310 = vld [vmem:[#allocation5 + $0x1a0] sm:$0xff]
    %v311 = vld [vmem:[#allocation5 + $0x1a8] sm:$0xff]
    %v312 = vld [vmem:[#allocation5 + $0x1b0] sm:$0xff]
    %v313 = vld [vmem:[#allocation5 + $0x1b8] sm:$0xff]
    %v314 = vld [vmem:[#allocation5 + $0x1c0] sm:$0xff]
    %v315 = vld [vmem:[#allocation5 + $0x1c8] sm:$0xff]
    %v316 = vld [vmem:[#allocation5 + $0x1d0] sm:$0xff]
    %v317 = vld [vmem:[#allocation5 + $0x1d8] sm:$0xff]
    %v318 = vld [vmem:[#allocation5 + $0x1e0] sm:$0xff]
    %v319 = vld [vmem:[#allocation5 + $0x1e8] sm:$0xff]
    %v320 = vld [vmem:[#allocation5 + $0x1f0] sm:$0xff]
    %v321 = vld [vmem:[#allocation5 + $0x1f8] sm:$0xff]
    %v322 = vld [vmem:[#allocation5 + $0x200] sm:$0xff]
    %v323 = vld [vmem:[#allocation5 + $0x208] sm:$0xff]
    %v324 = vld [vmem:[#allocation5 + $0x210] sm:$0xff]
    %v325 = vld [vmem:[#allocation5 + $0x218] sm:$0xff]
    %v326 = vld [vmem:[#allocation5 + $0x220] sm:$0xff]
    %v327 = vld [vmem:[#allocation5 + $0x228] sm:$0xff]
    %v328 = vld [vmem:[#allocation5 + $0x230] sm:$0xff]
    %v329 = vld [vmem:[#allocation5 + $0x238] sm:$0xff]
    %v330 = vld [vmem:[#allocation5 + $0x240] sm:$0xff]
    %v331 = vld [vmem:[#allocation5 + $0x248] sm:$0xff]
    %v332 = vld [vmem:[#allocation5 + $0x250] sm:$0xff]
    %v333 = vld [vmem:[#allocation5 + $0x258] sm:$0xff]
    %v334 = vld [vmem:[#allocation5 + $0x260] sm:$0xff]
    %v335 = vld [vmem:[#allocation5 + $0x268] sm:$0xff]
    %v336 = vld [vmem:[#allocation5 + $0x270] sm:$0xff]
    %v337 = vld [vmem:[#allocation5 + $0x278] sm:$0xff]
    %v338 = vld [vmem:[#allocation5 + $0x280] sm:$0xff]
    %v339 = vld [vmem:[#allocation5 + $0x288] sm:$0xff]
    %v340 = vld [vmem:[#allocation5 + $0x290] sm:$0xff]
    %v341 = vld [vmem:[#allocation5 + $0x298] sm:$0xff]
    %v342 = vld [vmem:[#allocation5 + $0x2a0] sm:$0xff]
    %v343 = vld [vmem:[#allocation5 + $0x2a8] sm:$0xff]
    %v344 = vld [vmem:[#allocation5 + $0x2b0] sm:$0xff]
    %v345 = vld [vmem:[#allocation5 + $0x2b8] sm:$0xff]
    %v346 = vld [vmem:[#allocation5 + $0x2c0] sm:$0xff]
    %v347 = vld [vmem:[#allocation5 + $0x2c8] sm:$0xff]
    %v348 = vld [vmem:[#allocation5 + $0x2d0] sm:$0xff]
    %v349 = vld [vmem:[#allocation5 + $0x2d8] sm:$0xff]
    %v350 = vld [vmem:[#allocation5 + $0x2e0] sm:$0xff]
    %v351 = vld [vmem:[#allocation5 + $0x2e8] sm:$0xff]
    %v352 = vld [vmem:[#allocation5 + $0x2f0] sm:$0xff]
    %v353 = vld [vmem:[#allocation5 + $0x2f8] sm:$0xff]
    %v354 = vld [vmem:[#allocation5 + $0x300] sm:$0xff]
    %v355 = vld [vmem:[#allocation5 + $0x308] sm:$0xff]
    %v356 = vld [vmem:[%s2] sm:$0x3]
    %v358 = vlaneseq
    %v359 = vshrl.u32 %v358, 7
    %v360 = vsub.s32 0, %v359
    %v361 = vrot.slane %v356, %v360
    %v362 = vlaneseq
    %v363 = vshrl.u32 %v362, 7
    %v364 = vsub.s32 1, %v363
    %v365 = vrot.slane %v356, %v364
    %v466 = vunpack.c.l.b16 %v258
    %v467 = vunpack.c.h.b16 %v258
    %v468 = vunpack.c.l.b16 %v259
    %v469 = vunpack.c.h.b16 %v259
    %v470 = vunpack.c.l.b16 %v260
    %v471 = vunpack.c.h.b16 %v260
    %v472 = vunpack.c.l.b16 %v261
    %v473 = vunpack.c.h.b16 %v261
    %v474 = vunpack.c.l.b16 %v262
    %v475 = vunpack.c.h.b16 %v262
    %v476 = vunpack.c.l.b16 %v263
    %v477 = vunpack.c.h.b16 %v263
    %v478 = vunpack.c.l.b16 %v264
    %v479 = vunpack.c.h.b16 %v264
    %v480 = vunpack.c.l.b16 %v265
    %v481 = vunpack.c.h.b16 %v265
    %v482 = vunpack.c.l.b16 %v266
    %v483 = vunpack.c.h.b16 %v266
    %v484 = vunpack.c.l.b16 %v267
    %v485 = vunpack.c.h.b16 %v267
    %v486 = vunpack.c.l.b16 %v268
    %v487 = vunpack.c.h.b16 %v268
    %v488 = vunpack.c.l.b16 %v269
    %v489 = vunpack.c.h.b16 %v269
    %v490 = vunpack.c.l.b16 %v270
    %v491 = vunpack.c.h.b16 %v270
    %v492 = vunpack.c.l.b16 %v271
    %v493 = vunpack.c.h.b16 %v271
    %v494 = vunpack.c.l.b16 %v272
    %v495 = vunpack.c.h.b16 %v272
    %v496 = vunpack.c.l.b16 %v273
    %v497 = vunpack.c.h.b16 %v273
    %v498 = vunpack.c.l.b16 %v274
    %v499 = vunpack.c.h.b16 %v274
    %v500 = vunpack.c.l.b16 %v275
    %v501 = vunpack.c.h.b16 %v275
    %v502 = vunpack.c.l.b16 %v276
    %v503 = vunpack.c.h.b16 %v276
    %v504 = vunpack.c.l.b16 %v277
    %v505 = vunpack.c.h.b16 %v277
    %v506 = vunpack.c.l.b16 %v278
    %v507 = vunpack.c.h.b16 %v278
    %v508 = vunpack.c.l.b16 %v279
    %v509 = vunpack.c.h.b16 %v279
    %v510 = vunpack.c.l.b16 %v280
    %v511 = vunpack.c.h.b16 %v280
    %v512 = vunpack.c.l.b16 %v281
    %v513 = vunpack.c.h.b16 %v281
    %v514 = vunpack.c.l.b16 %v282
    %v515 = vunpack.c.h.b16 %v282
    %v516 = vunpack.c.l.b16 %v283
    %v517 = vunpack.c.h.b16 %v283
    %v518 = vunpack.c.l.b16 %v284
    %v519 = vunpack.c.h.b16 %v284
    %v520 = vunpack.c.l.b16 %v285
    %v521 = vunpack.c.h.b16 %v285
    %v522 = vunpack.c.l.b16 %v286
    %v523 = vunpack.c.h.b16 %v286
    %v524 = vunpack.c.l.b16 %v287
    %v525 = vunpack.c.h.b16 %v287
    %v526 = vunpack.c.l.b16 %v288
    %v527 = vunpack.c.h.b16 %v288
    %v528 = vunpack.c.l.b16 %v289
    %v529 = vunpack.c.h.b16 %v289
    %v530 = vunpack.c.l.b16 %v290
    %v531 = vunpack.c.h.b16 %v290
    %v532 = vunpack.c.l.b16 %v291
    %v533 = vunpack.c.h.b16 %v291
    %v534 = vunpack.c.l.b16 %v292
    %v535 = vunpack.c.h.b16 %v292
    %v536 = vunpack.c.l.b16 %v293
    %v537 = vunpack.c.h.b16 %v293
    %v538 = vunpack.c.l.b16 %v294
    %v539 = vunpack.c.h.b16 %v294
    %v540 = vunpack.c.l.b16 %v295
    %v541 = vunpack.c.h.b16 %v295
    %v542 = vunpack.c.l.b16 %v296
    %v543 = vunpack.c.h.b16 %v296
    %v544 = vunpack.c.l.b16 %v297
    %v545 = vunpack.c.h.b16 %v297
    %v546 = vunpack.c.l.b16 %v298
    %v547 = vunpack.c.h.b16 %v298
    %v548 = vunpack.c.l.b16 %v299
    %v549 = vunpack.c.h.b16 %v299
    %v550 = vunpack.c.l.b16 %v300
    %v551 = vunpack.c.h.b16 %v300
    %v552 = vunpack.c.l.b16 %v301
    %v553 = vunpack.c.h.b16 %v301
    %v554 = vunpack.c.l.b16 %v302
    %v555 = vunpack.c.h.b16 %v302
    %v556 = vunpack.c.l.b16 %v303
    %v557 = vunpack.c.h.b16 %v303
    %v558 = vunpack.c.l.b16 %v304
    %v559 = vunpack.c.h.b16 %v304
    %v560 = vunpack.c.l.b16 %v305
    %v561 = vunpack.c.h.b16 %v305
    %v562 = vunpack.c.l.b16 %v306
    %v563 = vunpack.c.h.b16 %v306
    %v564 = vunpack.c.l.b16 %v307
    %v565 = vunpack.c.h.b16 %v307
    %v566 = vunpack.c.l.b16 %v308
    %v567 = vunpack.c.h.b16 %v308
    %v568 = vunpack.c.l.b16 %v309
    %v569 = vunpack.c.h.b16 %v309
    %v570 = vunpack.c.l.b16 %v310
    %v571 = vunpack.c.h.b16 %v310
    %v572 = vunpack.c.l.b16 %v311
    %v573 = vunpack.c.h.b16 %v311
    %v574 = vunpack.c.l.b16 %v312
    %v575 = vunpack.c.h.b16 %v312
    %v576 = vunpack.c.l.b16 %v313
    %v577 = vunpack.c.h.b16 %v313
    %v578 = vunpack.c.l.b16 %v314
    %v579 = vunpack.c.h.b16 %v314
    %v580 = vunpack.c.l.b16 %v315
    %v581 = vunpack.c.h.b16 %v315
    %v582 = vunpack.c.l.b16 %v316
    %v583 = vunpack.c.h.b16 %v316
    %v584 = vunpack.c.l.b16 %v317
    %v585 = vunpack.c.h.b16 %v317
    %v586 = vunpack.c.l.b16 %v318
    %v587 = vunpack.c.h.b16 %v318
    %v588 = vunpack.c.l.b16 %v319
    %v589 = vunpack.c.h.b16 %v319
    %v590 = vunpack.c.l.b16 %v320
    %v591 = vunpack.c.h.b16 %v320
    %v592 = vunpack.c.l.b16 %v321
    %v593 = vunpack.c.h.b16 %v321
    %v594 = vunpack.c.l.b16 %v322
    %v595 = vunpack.c.h.b16 %v322
    %v596 = vunpack.c.l.b16 %v323
    %v597 = vunpack.c.h.b16 %v323
    %v598 = vunpack.c.l.b16 %v324
    %v599 = vunpack.c.h.b16 %v324
    %v600 = vunpack.c.l.b16 %v325
    %v601 = vunpack.c.h.b16 %v325
    %v602 = vunpack.c.l.b16 %v326
    %v603 = vunpack.c.h.b16 %v326
    %v604 = vunpack.c.l.b16 %v327
    %v605 = vunpack.c.h.b16 %v327
    %v606 = vunpack.c.l.b16 %v328
    %v607 = vunpack.c.h.b16 %v328
    %v608 = vunpack.c.l.b16 %v329
    %v609 = vunpack.c.h.b16 %v329
    %v610 = vunpack.c.l.b16 %v330
    %v611 = vunpack.c.h.b16 %v330
    %v612 = vunpack.c.l.b16 %v331
    %v613 = vunpack.c.h.b16 %v331
    %v614 = vunpack.c.l.b16 %v332
    %v615 = vunpack.c.h.b16 %v332
    %v616 = vunpack.c.l.b16 %v333
    %v617 = vunpack.c.h.b16 %v333
    %v618 = vunpack.c.l.b16 %v334
    %v619 = vunpack.c.h.b16 %v334
    %v620 = vunpack.c.l.b16 %v335
    %v621 = vunpack.c.h.b16 %v335
    %v622 = vunpack.c.l.b16 %v336
    %v623 = vunpack.c.h.b16 %v336
    %v624 = vunpack.c.l.b16 %v337
    %v625 = vunpack.c.h.b16 %v337
    %v626 = vunpack.c.l.b16 %v338
    %v627 = vunpack.c.h.b16 %v338
    %v628 = vunpack.c.l.b16 %v339
    %v629 = vunpack.c.h.b16 %v339
    %v630 = vunpack.c.l.b16 %v340
    %v631 = vunpack.c.h.b16 %v340
    %v632 = vunpack.c.l.b16 %v341
    %v633 = vunpack.c.h.b16 %v341
    %v634 = vunpack.c.l.b16 %v342
    %v635 = vunpack.c.h.b16 %v342
    %v636 = vunpack.c.l.b16 %v343
    %v637 = vunpack.c.h.b16 %v343
    %v638 = vunpack.c.l.b16 %v344
    %v639 = vunpack.c.h.b16 %v344
    %v640 = vunpack.c.l.b16 %v345
    %v641 = vunpack.c.h.b16 %v345
    %v642 = vunpack.c.l.b16 %v346
    %v643 = vunpack.c.h.b16 %v346
    %v644 = vunpack.c.l.b16 %v347
    %v645 = vunpack.c.h.b16 %v347
    %v646 = vunpack.c.l.b16 %v348
    %v647 = vunpack.c.h.b16 %v348
    %v648 = vunpack.c.l.b16 %v349
    %v649 = vunpack.c.h.b16 %v349
    %v650 = vunpack.c.l.b16 %v350
    %v651 = vunpack.c.h.b16 %v350
    %v652 = vunpack.c.l.b16 %v351
    %v653 = vunpack.c.h.b16 %v351
    %v654 = vunpack.c.l.b16 %v352
    %v655 = vunpack.c.h.b16 %v352
    %v656 = vunpack.c.l.b16 %v353
    %v657 = vunpack.c.h.b16 %v353
    %v658 = vunpack.c.l.b16 %v354
    %v659 = vunpack.c.h.b16 %v354
    %v660 = vunpack.c.l.b16 %v355
    %v661 = vunpack.c.h.b16 %v355
    %v662 = vpack.c.b16 %v468, %v466
    %v663 = vpack.c.b16 %v469, %v467
    %v664 = vpack.c.b16 %v472, %v470
    %v665 = vpack.c.b16 %v473, %v471
    %v666 = vpack.c.b16 %v476, %v474
    %v667 = vpack.c.b16 %v477, %v475
    %v668 = vpack.c.b16 %v480, %v478
    %v669 = vpack.c.b16 %v481, %v479
    %v670 = vpack.c.b16 %v484, %v482
    %v671 = vpack.c.b16 %v485, %v483
    %v672 = vpack.c.b16 %v488, %v486
    %v673 = vpack.c.b16 %v489, %v487
    %v674 = vpack.c.b16 %v492, %v490
    %v675 = vpack.c.b16 %v493, %v491
    %v676 = vpack.c.b16 %v496, %v494
    %v677 = vpack.c.b16 %v497, %v495
    %v678 = vpack.c.b16 %v500, %v498
    %v679 = vpack.c.b16 %v501, %v499
    %v680 = vpack.c.b16 %v504, %v502
    %v681 = vpack.c.b16 %v505, %v503
    %v682 = vpack.c.b16 %v508, %v506
    %v683 = vpack.c.b16 %v509, %v507
    %v684 = vpack.c.b16 %v512, %v510
    %v685 = vpack.c.b16 %v513, %v511
    %v686 = vpack.c.b16 %v516, %v514
    %v687 = vpack.c.b16 %v517, %v515
    %v688 = vpack.c.b16 %v520, %v518
    %v689 = vpack.c.b16 %v521, %v519
    %v690 = vpack.c.b16 %v524, %v522
    %v691 = vpack.c.b16 %v525, %v523
    %v692 = vpack.c.b16 %v528, %v526
    %v693 = vpack.c.b16 %v529, %v527
    %v694 = vpack.c.b16 %v532, %v530
    %v695 = vpack.c.b16 %v533, %v531
    %v696 = vpack.c.b16 %v536, %v534
    %v697 = vpack.c.b16 %v537, %v535
    %v698 = vpack.c.b16 %v540, %v538
    %v699 = vpack.c.b16 %v541, %v539
    %v700 = vpack.c.b16 %v544, %v542
    %v701 = vpack.c.b16 %v545, %v543
    %v702 = vpack.c.b16 %v548, %v546
    %v703 = vpack.c.b16 %v549, %v547
    %v704 = vpack.c.b16 %v552, %v550
    %v705 = vpack.c.b16 %v553, %v551
    %v706 = vpack.c.b16 %v556, %v554
    %v707 = vpack.c.b16 %v557, %v555
    %v708 = vpack.c.b16 %v560, %v558
    %v709 = vpack.c.b16 %v561, %v559
    %v710 = vpack.c.b16 %v564, %v562
    %v711 = vpack.c.b16 %v565, %v563
    %v712 = vpack.c.b16 %v568, %v566
    %v713 = vpack.c.b16 %v569, %v567
    %v714 = vpack.c.b16 %v572, %v570
    %v715 = vpack.c.b16 %v573, %v571
    %v716 = vpack.c.b16 %v576, %v574
    %v717 = vpack.c.b16 %v577, %v575
    %v718 = vpack.c.b16 %v580, %v578
    %v719 = vpack.c.b16 %v581, %v579
    %v720 = vpack.c.b16 %v584, %v582
    %v721 = vpack.c.b16 %v585, %v583
    %v722 = vpack.c.b16 %v588, %v586
    %v723 = vpack.c.b16 %v589, %v587
    %v724 = vpack.c.b16 %v592, %v590
    %v725 = vpack.c.b16 %v593, %v591
    %v726 = vpack.c.b16 %v596, %v594
    %v727 = vpack.c.b16 %v597, %v595
    %v728 = vpack.c.b16 %v600, %v598
    %v729 = vpack.c.b16 %v601, %v599
    %v730 = vpack.c.b16 %v604, %v602
    %v731 = vpack.c.b16 %v605, %v603
    %v732 = vpack.c.b16 %v608, %v606
    %v733 = vpack.c.b16 %v609, %v607
    %v734 = vpack.c.b16 %v612, %v610
    %v735 = vpack.c.b16 %v613, %v611
    %v736 = vpack.c.b16 %v616, %v614
    %v737 = vpack.c.b16 %v617, %v615
    %v738 = vpack.c.b16 %v620, %v618
    %v739 = vpack.c.b16 %v621, %v619
    %v740 = vpack.c.b16 %v624, %v622
    %v741 = vpack.c.b16 %v625, %v623
    %v742 = vpack.c.b16 %v628, %v626
    %v743 = vpack.c.b16 %v629, %v627
    %v744 = vpack.c.b16 %v632, %v630
    %v745 = vpack.c.b16 %v633, %v631
    %v746 = vpack.c.b16 %v636, %v634
    %v747 = vpack.c.b16 %v637, %v635
    %v748 = vpack.c.b16 %v640, %v638
    %v749 = vpack.c.b16 %v641, %v639
    %v750 = vpack.c.b16 %v644, %v642
    %v751 = vpack.c.b16 %v645, %v643
    %v752 = vpack.c.b16 %v648, %v646
    %v753 = vpack.c.b16 %v649, %v647
    %v754 = vpack.c.b16 %v652, %v650
    %v755 = vpack.c.b16 %v653, %v651
    %v756 = vpack.c.b16 %v656, %v654
    %v757 = vpack.c.b16 %v657, %v655
    %v758 = vpack.c.b16 %v660, %v658
    %v759 = vpack.c.b16 %v661, %v659
    %vm858 = vcmask 130048
    %v860 = vsel %vm858, %v257, 0
    %862 = vmatprep.subr.bf16.mxu0 %v663
    %863 = vmatpush1.bf16.msra.mxu0 %v662
    %864 = vmatprep.subr.bf16.mxu0 %v665
    %865 = vmatpush1.bf16.msra.mxu0 %v664
    %866 = vmatprep.subr.bf16.mxu0 %v667
    %867 = vmatpush1.bf16.msra.mxu0 %v666
    %868 = vmatprep.subr.bf16.mxu0 %v669
    %869 = vmatpush1.bf16.msra.mxu0 %v668
    %870 = vmatprep.subr.bf16.mxu0 %v671
    %871 = vmatpush1.bf16.msra.mxu0 %v670
    %872 = vmatprep.subr.bf16.mxu0 %v673
    %873 = vmatpush1.bf16.msra.mxu0 %v672
    %874 = vmatprep.subr.bf16.mxu0 %v675
    %875 = vmatpush1.bf16.msra.mxu0 %v674
    %876 = vmatprep.subr.bf16.mxu0 %v677
    %877 = vmatpush1.bf16.msra.mxu0 %v676
    %878 = vmatprep.subr.bf16.mxu0 %v679
    %879 = vmatpush1.bf16.msra.mxu0 %v678
    %880 = vmatprep.subr.bf16.mxu0 %v681
    %881 = vmatpush1.bf16.msra.mxu0 %v680
    %882 = vmatprep.subr.bf16.mxu0 %v683
    %883 = vmatpush1.bf16.msra.mxu0 %v682
    %884 = vmatprep.subr.bf16.mxu0 %v685
    %885 = vmatpush1.bf16.msra.mxu0 %v684
    %886 = vmatprep.subr.bf16.mxu0 %v687
    %887 = vmatpush1.bf16.msra.mxu0 %v686
    %888 = vmatprep.subr.bf16.mxu0 %v689
    %889 = vmatpush1.bf16.msra.mxu0 %v688
    %890 = vmatprep.subr.bf16.mxu0 %v691
    %891 = vmatpush1.bf16.msra.mxu0 %v690
    %892 = vmatprep.subr.bf16.mxu0 %v693
    %893 = vmatpush1.bf16.msra.mxu0 %v692
    %894 = vmatprep.mubr.bf16.mxu0 %v252
    %895 = vmatmul.mubr.bf16.gmra.mrb[0].mxu0 %v251
    %v896 = vpop.f32.mrb[0].mxu0
    %v897 = vadd.f32 %v361, %v896
    %v898 = vpop.f32.mrb[0].mxu0
    %v899 = vadd.f32 %v365, %v898
    %v900 = vpop.f32.mrb[0].mxu0
    %v901 = vadd.f32 %v361, %v900
    %v902 = vpop.f32.mrb[0].mxu0
    %v903 = vadd.f32 %v365, %v902
    %904 = vdwg.mxu0
    %905 = vmatprep.subr.bf16.mxu0 %v695
    %906 = vmatpush1.bf16.msra.mxu0 %v694
    %907 = vmatprep.subr.bf16.mxu0 %v697
    %908 = vmatpush1.bf16.msra.mxu0 %v696
    %909 = vmatprep.subr.bf16.mxu0 %v699
    %910 = vmatpush1.bf16.msra.mxu0 %v698
    %911 = vmatprep.subr.bf16.mxu0 %v701
    %912 = vmatpush1.bf16.msra.mxu0 %v700
    %913 = vmatprep.subr.bf16.mxu0 %v703
    %914 = vmatpush1.bf16.msra.mxu0 %v702
    %915 = vmatprep.subr.bf16.mxu0 %v705
    %916 = vmatpush1.bf16.msra.mxu0 %v704
    %917 = vmatprep.subr.bf16.mxu0 %v707
    %918 = vmatpush1.bf16.msra.mxu0 %v706
    %919 = vmatprep.subr.bf16.mxu0 %v709
    %920 = vmatpush1.bf16.msra.mxu0 %v708
    %921 = vmatprep.subr.bf16.mxu0 %v711
    %922 = vmatpush1.bf16.msra.mxu0 %v710
    %923 = vmatprep.subr.bf16.mxu0 %v713
    %924 = vmatpush1.bf16.msra.mxu0 %v712
    %925 = vmatprep.subr.bf16.mxu0 %v715
    %926 = vmatpush1.bf16.msra.mxu0 %v714
    %927 = vmatprep.subr.bf16.mxu0 %v717
    %928 = vmatpush1.bf16.msra.mxu0 %v716
    %929 = vmatprep.subr.bf16.mxu0 %v719
    %930 = vmatpush1.bf16.msra.mxu0 %v718
    %931 = vmatprep.subr.bf16.mxu0 %v721
    %932 = vmatpush1.bf16.msra.mxu0 %v720
    %933 = vmatprep.subr.bf16.mxu0 %v723
    %934 = vmatpush1.bf16.msra.mxu0 %v722
    %935 = vmatprep.subr.bf16.mxu0 %v725
    %936 = vmatpush1.bf16.msra.mxu0 %v724
    %937 = vmatprep.mubr.bf16.mxu0 %v254
    %938 = vmatmul.mubr.bf16.gmra.mrb[0].mxu0 %v253
    %v939 = vpop.f32.mrb[0].mxu0
    %v940 = vadd.f32 %v897, %v939
    %v941 = vpop.f32.mrb[0].mxu0
    %v942 = vadd.f32 %v899, %v941
    %v943 = vpop.f32.mrb[0].mxu0
    %v944 = vadd.f32 %v901, %v943
    %v945 = vpop.f32.mrb[0].mxu0
    %v946 = vadd.f32 %v903, %v945
    %947 = vdwg.mxu0
    %948 = vmatprep.subr.bf16.mxu0 %v727
    %949 = vmatpush1.bf16.msra.mxu0 %v726
    %950 = vmatprep.subr.bf16.mxu0 %v729
    %951 = vmatpush1.bf16.msra.mxu0 %v728
    %952 = vmatprep.subr.bf16.mxu0 %v731
    %953 = vmatpush1.bf16.msra.mxu0 %v730
    %954 = vmatprep.subr.bf16.mxu0 %v733
    %955 = vmatpush1.bf16.msra.mxu0 %v732
    %956 = vmatprep.subr.bf16.mxu0 %v735
    %957 = vmatpush1.bf16.msra.mxu0 %v734
    %958 = vmatprep.subr.bf16.mxu0 %v737
    %959 = vmatpush1.bf16.msra.mxu0 %v736
    %960 = vmatprep.subr.bf16.mxu0 %v739
    %961 = vmatpush1.bf16.msra.mxu0 %v738
    %962 = vmatprep.subr.bf16.mxu0 %v741
    %963 = vmatpush1.bf16.msra.mxu0 %v740
    %964 = vmatprep.subr.bf16.mxu0 %v743
    %965 = vmatpush1.bf16.msra.mxu0 %v742
    %966 = vmatprep.subr.bf16.mxu0 %v745
    %967 = vmatpush1.bf16.msra.mxu0 %v744
    %968 = vmatprep.subr.bf16.mxu0 %v747
    %969 = vmatpush1.bf16.msra.mxu0 %v746
    %970 = vmatprep.subr.bf16.mxu0 %v749
    %971 = vmatpush1.bf16.msra.mxu0 %v748
    %972 = vmatprep.subr.bf16.mxu0 %v751
    %973 = vmatpush1.bf16.msra.mxu0 %v750
    %974 = vmatprep.subr.bf16.mxu0 %v753
    %975 = vmatpush1.bf16.msra.mxu0 %v752
    %976 = vmatprep.subr.bf16.mxu0 %v755
    %977 = vmatpush1.bf16.msra.mxu0 %v754
    %978 = vmatprep.subr.bf16.mxu0 %v757
    %979 = vmatpush1.bf16.msra.mxu0 %v756
    %980 = vmatprep.mubr.bf16.mxu0 %v256
    %981 = vmatmul.mubr.bf16.gmra.mrb[0].mxu0 %v255
    %v982 = vpop.f32.mrb[0].mxu0
    %v983 = vadd.f32 %v940, %v982
    %v984 = vpop.f32.mrb[0].mxu0
    %v985 = vadd.f32 %v942, %v984
    %v986 = vpop.f32.mrb[0].mxu0
    %v987 = vadd.f32 %v944, %v986
    %v988 = vpop.f32.mrb[0].mxu0
    %v989 = vadd.f32 %v946, %v988
    %990 = vdwg.mxu0
    %991 = vmatprep.subr.bf16.mxu0 %v759
    %992 = vmatpush1.bf16.msra.mxu0 %v758
    %993 = vmatprep.subr.bf16.mxu0 0
    %994 = vmatpush1.bf16.msra.mxu0 0
    %995 = vmatprep.subr.bf16.mxu0 0
    %996 = vmatpush1.bf16.msra.mxu0 0
    %997 = vmatprep.subr.bf16.mxu0 0
    %998 = vmatpush1.bf16.msra.mxu0 0
    %999 = vmatprep.subr.bf16.mxu0 0
    %1000 = vmatpush1.bf16.msra.mxu0 0
    %1001 = vmatprep.subr.bf16.mxu0 0
    %1002 = vmatpush1.bf16.msra.mxu0 0
    %1003 = vmatprep.subr.bf16.mxu0 0
    %1004 = vmatpush1.bf16.msra.mxu0 0
    %1005 = vmatprep.subr.bf16.mxu0 0
    %1006 = vmatpush1.bf16.msra.mxu0 0
    %1007 = vmatprep.subr.bf16.mxu0 0
    %1008 = vmatpush1.bf16.msra.mxu0 0
    %1009 = vmatprep.subr.bf16.mxu0 0
    %1010 = vmatpush1.bf16.msra.mxu0 0
    %1011 = vmatprep.subr.bf16.mxu0 0
    %1012 = vmatpush1.bf16.msra.mxu0 0
    %1013 = vmatprep.subr.bf16.mxu0 0
    %1014 = vmatpush1.bf16.msra.mxu0 0
    %1015 = vmatprep.subr.bf16.mxu0 0
    %1016 = vmatpush1.bf16.msra.mxu0 0
    %1017 = vmatprep.subr.bf16.mxu0 0
    %1018 = vmatpush1.bf16.msra.mxu0 0
    %1019 = vmatprep.subr.bf16.mxu0 0
    %1020 = vmatpush1.bf16.msra.mxu0 0
    %1021 = vmatprep.subr.bf16.mxu0 0
    %1022 = vmatpush1.bf16.msra.mxu0 0
    %1023 = vmatprep.mubr.bf16.mxu0 0
    %1024 = vmatmul.mubr.bf16.gmra.mrb[0].mxu0 %v860
    %v1025 = vpop.f32.mrb[0].mxu0
    %v1026 = vadd.f32 %v983, %v1025
    %v1027 = vpop.f32.mrb[0].mxu0
    %v1028 = vadd.f32 %v985, %v1027
    %v1029 = vpop.f32.mrb[0].mxu0
    %v1030 = vadd.f32 %v987, %v1029
    %v1031 = vpop.f32.mrb[0].mxu0
    %v1032 = vadd.f32 %v989, %v1031
    %1033 = vdwg.mxu0
    %v1034 = vmax.f32 %v1026, 0.0
    %v1035 = vmax.f32 %v1028, 0.0
    %v1036 = vmax.f32 %v1030, 0.0
    %v1037 = vmax.f32 %v1032, 0.0
    %v1038 = vpack.c.bf16 %v1036, %v1034
    %v1039 = vpack.c.bf16 %v1037, %v1035
    %v1040 = vld [vmem:[#allocation7] sm:$0xf]
    %v1041 = vld [vmem:[#allocation7 + $0x4] sm:$0xf]
    %v1042 = vld [vmem:[#allocation7 + $0x8] sm:$0xf]
    %v1043 = vld [vmem:[#allocation7 + $0xc] sm:$0xf]
    %v1044 = vld [vmem:[#allocation7 + $0x10] sm:$0xf]
    %v1045 = vld [vmem:[#allocation7 + $0x14] sm:$0xf]
    %v1046 = vld [vmem:[#allocation7 + $0x18] sm:$0xf]
    %v1047 = vld [vmem:[#allocation7 + $0x1c] sm:$0xf]
    %v1048 = vld [vmem:[#allocation7 + $0x20] sm:$0xf]
    %v1049 = vld [vmem:[#allocation7 + $0x24] sm:$0xf]
    %v1050 = vld [vmem:[#allocation7 + $0x28] sm:$0xf]
    %v1051 = vld [vmem:[#allocation7 + $0x2c] sm:$0xf]
    %v1052 = vld [vmem:[#allocation7 + $0x30] sm:$0xf]
    %v1053 = vld [vmem:[#allocation7 + $0x34] sm:$0xf]
    %v1054 = vld [vmem:[#allocation7 + $0x38] sm:$0xf]
    %v1055 = vld [vmem:[#allocation7 + $0x3c] sm:$0xf]
    %v1056 = vld [vmem:[#allocation7 + $0x40] sm:$0xf]
    %v1057 = vld [vmem:[#allocation7 + $0x44] sm:$0xf]
    %v1058 = vld [vmem:[#allocation7 + $0x48] sm:$0xf]
    %v1059 = vld [vmem:[#allocation7 + $0x4c] sm:$0xf]
    %v1060 = vld [vmem:[#allocation7 + $0x50] sm:$0xf]
    %v1061 = vld [vmem:[#allocation7 + $0x54] sm:$0xf]
    %v1062 = vld [vmem:[#allocation7 + $0x58] sm:$0xf]
    %v1063 = vld [vmem:[#allocation7 + $0x5c] sm:$0xf]
    %v1064 = vld [vmem:[#allocation7 + $0x60] sm:$0xf]
    %v1065 = vld [vmem:[#allocation7 + $0x64] sm:$0xf]
    %v1066 = vld [vmem:[#allocation7 + $0x68] sm:$0xf]
    %v1067 = vld [vmem:[#allocation7 + $0x6c] sm:$0xf]
    %v1068 = vld [vmem:[#allocation7 + $0x70] sm:$0xf]
    %v1069 = vld [vmem:[#allocation7 + $0x74] sm:$0xf]
    %v1070 = vld [vmem:[#allocation7 + $0x78] sm:$0xf]
    %v1071 = vld [vmem:[#allocation7 + $0x7c] sm:$0xf]
    %v1072 = vld [vmem:[%s4] sm:$0x1]
    %v1074 = vlaneseq
    %v1075 = vshrl.u32 %v1074, 7
    %v1076 = vsub.s32 0, %v1075
    %v1077 = vrot.slane %v1072, %v1076
    %v1111 = vunpack.c.l.b16 %v1040
    %v1112 = vunpack.c.l.b16 %v1041
    %v1113 = vunpack.c.l.b16 %v1042
    %v1114 = vunpack.c.l.b16 %v1043
    %v1115 = vunpack.c.l.b16 %v1044
    %v1116 = vunpack.c.l.b16 %v1045
    %v1117 = vunpack.c.l.b16 %v1046
    %v1118 = vunpack.c.l.b16 %v1047
    %v1119 = vunpack.c.l.b16 %v1048
    %v1120 = vunpack.c.l.b16 %v1049
    %v1121 = vunpack.c.l.b16 %v1050
    %v1122 = vunpack.c.l.b16 %v1051
    %v1123 = vunpack.c.l.b16 %v1052
    %v1124 = vunpack.c.l.b16 %v1053
    %v1125 = vunpack.c.l.b16 %v1054
    %v1126 = vunpack.c.l.b16 %v1055
    %v1127 = vunpack.c.l.b16 %v1056
    %v1128 = vunpack.c.l.b16 %v1057
    %v1129 = vunpack.c.l.b16 %v1058
    %v1130 = vunpack.c.l.b16 %v1059
    %v1131 = vunpack.c.l.b16 %v1060
    %v1132 = vunpack.c.l.b16 %v1061
    %v1133 = vunpack.c.l.b16 %v1062
    %v1134 = vunpack.c.l.b16 %v1063
    %v1135 = vunpack.c.l.b16 %v1064
    %v1136 = vunpack.c.l.b16 %v1065
    %v1137 = vunpack.c.l.b16 %v1066
    %v1138 = vunpack.c.l.b16 %v1067
    %v1139 = vunpack.c.l.b16 %v1068
    %v1140 = vunpack.c.l.b16 %v1069
    %v1141 = vunpack.c.l.b16 %v1070
    %v1142 = vunpack.c.l.b16 %v1071
    %v1143 = vpack.c.b16 %v1112, %v1111
    %v1144 = vpack.c.b16 %v1114, %v1113
    %v1145 = vpack.c.b16 %v1116, %v1115
    %v1146 = vpack.c.b16 %v1118, %v1117
    %v1147 = vpack.c.b16 %v1120, %v1119
    %v1148 = vpack.c.b16 %v1122, %v1121
    %v1149 = vpack.c.b16 %v1124, %v1123
    %v1150 = vpack.c.b16 %v1126, %v1125
    %v1151 = vpack.c.b16 %v1128, %v1127
    %v1152 = vpack.c.b16 %v1130, %v1129
    %v1153 = vpack.c.b16 %v1132, %v1131
    %v1154 = vpack.c.b16 %v1134, %v1133
    %v1155 = vpack.c.b16 %v1136, %v1135
    %v1156 = vpack.c.b16 %v1138, %v1137
    %v1157 = vpack.c.b16 %v1140, %v1139
    %v1158 = vpack.c.b16 %v1142, %v1141
    %1175 = vmatprep.subr.bf16.mxu0 0
    %1176 = vmatpush1.bf16.msra.mxu0 %v1143
    %1177 = vmatprep.subr.bf16.mxu0 0
    %1178 = vmatpush1.bf16.msra.mxu0 %v1144
    %1179 = vmatprep.subr.bf16.mxu0 0
    %1180 = vmatpush1.bf16.msra.mxu0 %v1145
    %1181 = vmatprep.subr.bf16.mxu0 0
    %1182 = vmatpush1.bf16.msra.mxu0 %v1146
    %1183 = vmatprep.subr.bf16.mxu0 0
    %1184 = vmatpush1.bf16.msra.mxu0 %v1147
    %1185 = vmatprep.subr.bf16.mxu0 0
    %1186 = vmatpush1.bf16.msra.mxu0 %v1148
    %1187 = vmatprep.subr.bf16.mxu0 0
    %1188 = vmatpush1.bf16.msra.mxu0 %v1149
    %1189 = vmatprep.subr.bf16.mxu0 0
    %1190 = vmatpush1.bf16.msra.mxu0 %v1150
    %1191 = vmatprep.subr.bf16.mxu0 0
    %1192 = vmatpush1.bf16.msra.mxu0 %v1151
    %1193 = vmatprep.subr.bf16.mxu0 0
    %1194 = vmatpush1.bf16.msra.mxu0 %v1152
    %1195 = vmatprep.subr.bf16.mxu0 0
    %1196 = vmatpush1.bf16.msra.mxu0 %v1153
    %1197 = vmatprep.subr.bf16.mxu0 0
    %1198 = vmatpush1.bf16.msra.mxu0 %v1154
    %1199 = vmatprep.subr.bf16.mxu0 0
    %1200 = vmatpush1.bf16.msra.mxu0 %v1155
    %1201 = vmatprep.subr.bf16.mxu0 0
    %1202 = vmatpush1.bf16.msra.mxu0 %v1156
    %1203 = vmatprep.subr.bf16.mxu0 0
    %1204 = vmatpush1.bf16.msra.mxu0 %v1157
    %1205 = vmatprep.subr.bf16.mxu0 0
    %1206 = vmatpush1.bf16.msra.mxu0 %v1158
    %1207 = vmatprep.mubr.bf16.mxu0 %v1039
    %1208 = vmatmul.mubr.bf16.gmra.mrb[0].mxu0 %v1038
    %v1209 = vpop.f32.mrb[0].mxu0
    %v1210 = vadd.f32 %v1077, %v1209
    %v1211 = vpop.f32.mrb[0].mxu0
    %v1212 = vpop.f32.mrb[0].mxu0
    %v1213 = vadd.f32 %v1077, %v1212
    %v1214 = vpop.f32.mrb[0].mxu0
    %1215 = vdwg.mxu0
    %1216 = vst [vmem:[#allocation8] sm:$0xff] %v1210
    %1217 = vst [vmem:[#allocation8 + $0x8] sm:$0xff] %v1213
    // Predicated region
    $region34: #{tpu_custom_call.1} parent=1 // pred_check
      _
    $region35: #{tpu_custom_call.1} parent=1 // pred_check_branch
      %1219 = sbr.rel (0) target = $region37
    $region36: #{tpu_custom_call.1} parent=1 // pred_region
      %s1221 = ssub.s32 256, 32
      %1222 = vsyncadd [#allocation4], %s1221
      %s1223 = sshll.u32 [#allocation8], 4
      %s1224 = int_to_ptr.vmem [resolvable:$true] %s1223
      %1229 = dma.vmem_to_hbm [thread:$0]  %s1224, 32, %s5, [#allocation4], 32, 32, 2
    $region37: #{tpu_custom_call.1} parent=1 // pred_fallthru
      _
    // Predicated region
    $region38: #{tpu_custom_call.1} parent=1 // pred_check
      _
    $region39: #{tpu_custom_call.1} parent=1 // pred_check_branch
      %1231 = sbr.rel (0) target = $region41
    $region40: #{tpu_custom_call.1} parent=1 // pred_region
      %1232 = dma.done [#allocation4], 256
    $region41: #{tpu_custom_call.1} parent=1 // pred_fallthru
      _
    %1233 = vsyncpa [#allocation3], 1
    %1234 = vsyncpa [#allocation6], 1
    %1235 = vsyncpa [#allocation4], 1

</llo_original>
